<compile_context>
chip_gen: v5e
topology: v5e:2x2
jax: 0.10.0
libtpu: 0.0.40
codegen_flags: <defaults>
</compile_context>

<pallas_src>
import jax
import jax.numpy as jnp
from jax.experimental import pallas as pl
from jax.experimental.pallas import tpu as pltpu


def spatial_attention_kernel(x_ref, w_emb_ref, b_emb_ref, w_fs_ref, b_fs_ref,
                             r_ref, c_ref, out_ref):
    """One batch tile, every operand lane-dense.

    x_ref     : (TB, S*D)       input rows, sections concatenated along lanes
    w_emb_ref : (S*D, S*E)      block-diagonal Embedding weight
    b_emb_ref : (1, S*E)        tiled Embedding bias
    w_fs_ref  : (S*E, S*E + S)  block-diag Feature weight ++ per-section Score cols
    b_fs_ref  : (1, S*E + S)    tiled Feature bias ++ Score bias
    r_ref     : (S, S*E)        attn expansion matrix   R[s, s*E + e] = 1
    c_ref     : (S*E, E)        section reduction matrix C[s*E + e, e] = 1
    out_ref   : (TB, E)
    """
    E = c_ref.shape[1]
    SE = w_emb_ref.shape[1]

    x = x_ref[...]                                                 # (TB, S*D)

    # Embedding (Linear + ReLU): one dense MXU matmul, K = S*D, N = S*E.
    emb = jnp.dot(x, w_emb_ref[...], preferred_element_type=jnp.float32)
    emb = jnp.maximum(emb + b_emb_ref[...], 0.0)                   # (TB, S*E)

    # Feature + Score fused into one matmul; the last S output columns are the
    # per-section scores, already lane-dense -> no VPU/XLU score reduction.
    fs = jnp.dot(emb, w_fs_ref[...], preferred_element_type=jnp.float32)
    fs = fs + b_fs_ref[...]                                        # (TB, S*E + S)
    feats = fs[:, :SE]                                             # (TB, S*E)
    scores = fs[:, SE:]                                            # (TB, S)

    # Numerically stable softmax over the section (lane) axis; exact reciprocal
    # (EUP throughput is not the bottleneck here).
    m = jnp.max(scores, axis=-1, keepdims=True)
    e = jnp.exp(scores - m)
    attn = e / jnp.sum(e, axis=-1, keepdims=True)                  # (TB, S)

    # Weighted sum over sections with no lane<->sublane relayout:
    # expand attn to (TB, S*E) and reduce over sections, both on the idle MXU.
    attn_exp = jnp.dot(attn, r_ref[...], preferred_element_type=jnp.float32)
    out_ref[...] = jnp.dot(feats * attn_exp, c_ref[...],
                           preferred_element_type=jnp.float32)     # (TB, E)


def spatial_attention(x, params, n_section, *, batch_tile=1024):
    """x: (B, input_dim) float32. Returns (B, output_dim) float32.

    batch_tile guidance: 1024 fits the default scoped-VMEM limit on all TPU
    generations after the lane-dense layout; raise to 2048-4096 on v7x (and
    keep Bp // TB >= 2 so both TensorCores get grid steps).
    """
    w_emb, b_emb, w_sc, b_sc, w_ft, b_ft = params
    B, input_dim = x.shape
    S = n_section
    D = input_dim // S
    assert D * S == input_dim, "input_dim must be divisible by n_section"
    E = w_emb.shape[1]
    f32 = jnp.float32

    # ---- Build lane-dense, block-diagonal parameters (once, in the wrapper).
    eye_s = jnp.eye(S, dtype=f32)
    w_emb_bd = jnp.kron(eye_s, w_emb.astype(f32))                  # (S*D, S*E)
    b_emb_bd = jnp.tile(b_emb.astype(f32), (1, S))                 # (1, S*E)
    w_ft_bd = jnp.kron(eye_s, w_ft.astype(f32))                    # (S*E, S*E)
    w_sc_bd = jnp.kron(eye_s, w_sc.astype(f32).T)                  # (S*E, S)
    w_fs = jnp.concatenate([w_ft_bd, w_sc_bd], axis=1)             # (S*E, S*E+S)
    b_fs = jnp.concatenate([jnp.tile(b_ft.astype(f32), (1, S)),
                            jnp.full((1, S), b_sc[0, 0], f32)], axis=1)
    r_mat = jnp.kron(eye_s, jnp.ones((1, E), f32))                 # (S, S*E)
    c_mat = jnp.tile(jnp.eye(E, dtype=f32), (S, 1))                # (S*E, E)

    # ---- Batch tiling: single block for small B, else 8-aligned tiles + pad.
    if B <= batch_tile:
        TB, Bp = B, B
    else:
        TB = batch_tile                       # multiple of 8
        Bp = ((B + TB - 1) // TB) * TB
    xp = x.astype(f32)
    if Bp != B:
        xp = jnp.pad(xp, ((0, Bp - B), (0, 0)))

    const2 = lambda b: (0, 0)

    out = pl.pallas_call(
        spatial_attention_kernel,
        out_shape=jax.ShapeDtypeStruct((Bp, E), jnp.float32),
        grid_spec=pl.GridSpec(
            grid=(Bp // TB,),
            in_specs=[
                pl.BlockSpec((TB, S * D), lambda b: (b, 0)),       # x stream
                pl.BlockSpec(w_emb_bd.shape, const2),              # resident weights
                pl.BlockSpec(b_emb_bd.shape, const2),
                pl.BlockSpec(w_fs.shape, const2),
                pl.BlockSpec(b_fs.shape, const2),
                pl.BlockSpec(r_mat.shape, const2),
                pl.BlockSpec(c_mat.shape, const2),
            ],
            out_specs=pl.BlockSpec((TB, E), lambda b: (b, 0)),
        ),
        compiler_params=pltpu.CompilerParams(
            dimension_semantics=("parallel",)),
    )(xp, w_emb_bd, b_emb_bd, w_fs, b_fs, r_mat, c_mat)
    return out[:B]


def spatial_attention_ref(x, params, n_section):
    """Pure-JAX reference mirroring the PyTorch forward."""
    w_emb, b_emb, w_sc, b_sc, w_ft, b_ft = params
    B, input_dim = x.shape
    D = input_dim // n_section
    x3 = x.reshape(B, n_section, D)
    emb = jnp.maximum(jnp.einsum("bsd,de->bse", x3, w_emb) + b_emb[None], 0.0)
    scores = jnp.einsum("bse,e->bs", emb, w_sc[0])[..., None] + b_sc[0, 0]
    feats = jnp.einsum("bse,ef->bsf", emb, w_ft) + b_ft[None]
    attn = jax.nn.softmax(scores, axis=1)
    return jnp.sum(feats * attn, axis=1)


if __name__ == "__main__":
    # Small, deterministic problem consistent with the module:
    #   batch=2, n_section=8, section_size=16 -> input_dim=128, output_dim=32
    B = 2
    n_section = 8
    section_size = 16
    input_dim = n_section * section_size
    output_dim = 32

    key = jax.random.PRNGKey(0)
    kx, k1, k2, k3, k4, k5, k6 = jax.random.split(key, 7)

    x = jax.random.normal(kx, (B, input_dim), dtype=jnp.float32)

    # Deterministic synthetic parameters (no checkpoint load).
    w_emb = jax.random.normal(k1, (section_size, output_dim), jnp.float32) * 0.1
    b_emb = jax.random.normal(k2, (1, output_dim), jnp.float32) * 0.1
    w_sc = jax.random.normal(k3, (1, output_dim), jnp.float32) * 0.1
    b_sc = jax.random.normal(k4, (1, 1), jnp.float32) * 0.1
    w_ft = jax.random.normal(k5, (output_dim, output_dim), jnp.float32) * 0.1
    b_ft = jax.random.normal(k6, (1, output_dim), jnp.float32) * 0.1
    params = (w_emb, b_emb, w_sc, b_sc, w_ft, b_ft)

    out = spatial_attention(x, params, n_section)
    out = jax.block_until_ready(out)

    ref = spatial_attention_ref(x, params, n_section)
    assert out.shape == (B, output_dim)
    # Tolerance accounts for possible reduced-precision MXU passes on f32 dots.
    assert jnp.allclose(out, ref, atol=5e-3, rtol=5e-3), "mismatch vs reference"

    print("KERNEL_OK")
</pallas_src>

<mosaic_0001>
module attributes {stable_mosaic.version = 11 : i64} {
  func.func @spatial_attention_kernel(%arg0: i32, %arg1: memref<2x128xf32, #tpu.memory_space<vmem>>, %arg2: memref<128x256xf32, #tpu.memory_space<vmem>>, %arg3: memref<1x256xf32, #tpu.memory_space<vmem>>, %arg4: memref<256x264xf32, #tpu.memory_space<vmem>>, %arg5: memref<1x264xf32, #tpu.memory_space<vmem>>, %arg6: memref<8x256xf32, #tpu.memory_space<vmem>>, %arg7: memref<256x32xf32, #tpu.memory_space<vmem>>, %arg8: memref<2x32xf32, #tpu.memory_space<vmem>>) attributes {dimension_semantics = [#tpu.dimension_semantics<parallel>], iteration_bounds = array<i64: 1>, scalar_prefetch = 0 : i64, scratch_operands = 0 : i64, tpu.core_type = #tpu.core_type<tc>, window_params = [{transform_indices = @transform_0, window_bounds = array<i64: 2, 128>}, {pipeline_mode = #tpu.pipeline_mode<synchronous>, transform_indices = @transform_1, window_bounds = array<i64: 128, 256>}, {pipeline_mode = #tpu.pipeline_mode<synchronous>, transform_indices = @transform_2, window_bounds = array<i64: 1, 256>}, {pipeline_mode = #tpu.pipeline_mode<synchronous>, transform_indices = @transform_3, window_bounds = array<i64: 256, 264>}, {pipeline_mode = #tpu.pipeline_mode<synchronous>, transform_indices = @transform_4, window_bounds = array<i64: 1, 264>}, {pipeline_mode = #tpu.pipeline_mode<synchronous>, transform_indices = @transform_5, window_bounds = array<i64: 8, 256>}, {pipeline_mode = #tpu.pipeline_mode<synchronous>, transform_indices = @transform_6, window_bounds = array<i64: 256, 32>}, {transform_indices = @transform_7, window_bounds = array<i64: 2, 32>}]} {
    %c0 = arith.constant 0 : index
    %c0_0 = arith.constant 0 : index
    %0 = vector.load %arg1[%c0, %c0_0] : memref<2x128xf32, #tpu.memory_space<vmem>>, vector<2x128xf32>
    %c0_1 = arith.constant 0 : index
    %c0_2 = arith.constant 0 : index
    %1 = vector.load %arg2[%c0_1, %c0_2] : memref<128x256xf32, #tpu.memory_space<vmem>>, vector<128x256xf32>
    %cst = arith.constant dense<0.000000e+00> : vector<2x256xf32>
    %2 = tpu.matmul %0, %1, %cst {dimension_numbers = #tpu.dot_dimension_numbers<[1], [0], [0], [1], [0, 0, 1, 1], [], []>} : vector<2x128xf32>, vector<128x256xf32>, vector<2x256xf32> -> vector<2x256xf32>
    %c0_3 = arith.constant 0 : index
    %c0_4 = arith.constant 0 : index
    %3 = vector.load %arg3[%c0_3, %c0_4] : memref<1x256xf32, #tpu.memory_space<vmem>>, vector<1x256xf32>
    %4 = vector.broadcast %3 : vector<1x256xf32> to vector<2x256xf32>
    %5 = arith.addf %2, %4 : vector<2x256xf32>
    %cst_5 = arith.constant 0.000000e+00 : f32
    %6 = vector.broadcast %cst_5 : f32 to vector<2x256xf32>
    %7 = arith.maximumf %5, %6 : vector<2x256xf32>
    %c0_6 = arith.constant 0 : index
    %c0_7 = arith.constant 0 : index
    %8 = vector.load %arg4[%c0_6, %c0_7] : memref<256x264xf32, #tpu.memory_space<vmem>>, vector<256x264xf32>
    %cst_8 = arith.constant dense<0.000000e+00> : vector<2x264xf32>
    %9 = tpu.matmul %7, %8, %cst_8 {dimension_numbers = #tpu.dot_dimension_numbers<[1], [0], [0], [1], [0, 0, 1, 1], [], []>} : vector<2x256xf32>, vector<256x264xf32>, vector<2x264xf32> -> vector<2x264xf32>
    %c0_9 = arith.constant 0 : index
    %c0_10 = arith.constant 0 : index
    %10 = vector.load %arg5[%c0_9, %c0_10] : memref<1x264xf32, #tpu.memory_space<vmem>>, vector<1x264xf32>
    %11 = vector.broadcast %10 : vector<1x264xf32> to vector<2x264xf32>
    %12 = arith.addf %9, %11 : vector<2x264xf32>
    %13 = vector.extract_strided_slice %12 {offsets = [0, 0], sizes = [2, 256], strides = [1, 1]} : vector<2x264xf32> to vector<2x256xf32>
    %14 = vector.extract_strided_slice %12 {offsets = [0, 256], sizes = [2, 8], strides = [1, 1]} : vector<2x264xf32> to vector<2x8xf32>
    %cst_11 = arith.constant dense<0xFF800000> : vector<2xf32>
    %15 = vector.multi_reduction <maximumf>, %14, %cst_11 [1] : vector<2x8xf32> to vector<2xf32>
    %16 = vector.shape_cast %15 : vector<2xf32> to vector<2x1xf32>
    %17 = vector.broadcast %16 : vector<2x1xf32> to vector<2x8xf32>
    %18 = arith.subf %14, %17 : vector<2x8xf32>
    %19 = math.exp %18 : vector<2x8xf32>
    %cst_12 = arith.constant dense<0.000000e+00> : vector<2xf32>
    %20 = vector.multi_reduction <add>, %19, %cst_12 [1] : vector<2x8xf32> to vector<2xf32>
    %21 = vector.shape_cast %20 : vector<2xf32> to vector<2x1xf32>
    %22 = vector.broadcast %21 : vector<2x1xf32> to vector<2x8xf32>
    %23 = arith.divf %19, %22 : vector<2x8xf32>
    %c0_13 = arith.constant 0 : index
    %c0_14 = arith.constant 0 : index
    %24 = vector.load %arg6[%c0_13, %c0_14] : memref<8x256xf32, #tpu.memory_space<vmem>>, vector<8x256xf32>
    %cst_15 = arith.constant dense<0.000000e+00> : vector<2x256xf32>
    %25 = tpu.matmul %23, %24, %cst_15 {dimension_numbers = #tpu.dot_dimension_numbers<[1], [0], [0], [1], [0, 0, 1, 1], [], []>} : vector<2x8xf32>, vector<8x256xf32>, vector<2x256xf32> -> vector<2x256xf32>
    %26 = arith.mulf %13, %25 : vector<2x256xf32>
    %c0_16 = arith.constant 0 : index
    %c0_17 = arith.constant 0 : index
    %27 = vector.load %arg7[%c0_16, %c0_17] : memref<256x32xf32, #tpu.memory_space<vmem>>, vector<256x32xf32>
    %cst_18 = arith.constant dense<0.000000e+00> : vector<2x32xf32>
    %28 = tpu.matmul %26, %27, %cst_18 {dimension_numbers = #tpu.dot_dimension_numbers<[1], [0], [0], [1], [0, 0, 1, 1], [], []>} : vector<2x256xf32>, vector<256x32xf32>, vector<2x32xf32> -> vector<2x32xf32>
    %c0_19 = arith.constant 0 : index
    %c0_20 = arith.constant 0 : index
    %29 = vector.load %arg8[%c0_19, %c0_20] : memref<2x32xf32, #tpu.memory_space<vmem>>, vector<2x32xf32>
    tpu.vector_store %arg8[%c0_19, %c0_20], %28 {strides = array<i32>} : memref<2x32xf32, #tpu.memory_space<vmem>>, vector<2x32xf32>,
    return
  }
  func.func @transform_0(%arg0: i32) -> (i32, i32) {
    %c0_i32 = arith.constant 0 : i32
    %c0_i32_0 = arith.constant 0 : i32
    return %arg0, %c0_i32 : i32, i32
  }
  func.func @transform_1(%arg0: i32) -> (i32, i32) {
    %c0_i32 = arith.constant 0 : i32
    %c0_i32_0 = arith.constant 0 : i32
    %c0_i32_1 = arith.constant 0 : i32
    return %c0_i32, %c0_i32_0 : i32, i32
  }
  func.func @transform_2(%arg0: i32) -> (i32, i32) {
    %c0_i32 = arith.constant 0 : i32
    %c0_i32_0 = arith.constant 0 : i32
    %c0_i32_1 = arith.constant 0 : i32
    return %c0_i32, %c0_i32_0 : i32, i32
  }
  func.func @transform_3(%arg0: i32) -> (i32, i32) {
    %c0_i32 = arith.constant 0 : i32
    %c0_i32_0 = arith.constant 0 : i32
    %c0_i32_1 = arith.constant 0 : i32
    return %c0_i32, %c0_i32_0 : i32, i32
  }
  func.func @transform_4(%arg0: i32) -> (i32, i32) {
    %c0_i32 = arith.constant 0 : i32
    %c0_i32_0 = arith.constant 0 : i32
    %c0_i32_1 = arith.constant 0 : i32
    return %c0_i32, %c0_i32_0 : i32, i32
  }
  func.func @transform_5(%arg0: i32) -> (i32, i32) {
    %c0_i32 = arith.constant 0 : i32
    %c0_i32_0 = arith.constant 0 : i32
    %c0_i32_1 = arith.constant 0 : i32
    return %c0_i32, %c0_i32_0 : i32, i32
  }
  func.func @transform_6(%arg0: i32) -> (i32, i32) {
    %c0_i32 = arith.constant 0 : i32
    %c0_i32_0 = arith.constant 0 : i32
    %c0_i32_1 = arith.constant 0 : i32
    return %c0_i32, %c0_i32_0 : i32, i32
  }
  func.func @transform_7(%arg0: i32) -> (i32, i32) {
    %c0_i32 = arith.constant 0 : i32
    %c0_i32_0 = arith.constant 0 : i32
    return %arg0, %c0_i32 : i32, i32
  }
}

</mosaic_0001>

<llo_original>
// kernel: tpu_custom_call.1
$region0: #{tpu_custom_call.1}
  #allocation0 [shape = 'u32[]', space=smem, size = 0x4, offset = 0x4, fixed_abs, tag = 'smem constant byte address 0x4 - core index']
  #allocation1 [shape = 'u32[72,128]{1,0:T(1,128)}', space=vmem, size = 0x9000, scoped, tag = 'internal scratch']
  %s0 = inlined_call_operand.vmem [shape: f32[2,128], index: 0, kind: input, shape index: {}]
  %s1 = inlined_call_operand.vmem [shape: f32[128,256], index: 1, kind: input, shape index: {}]
  %s2 = inlined_call_operand.vmem [shape: f32[1,256], index: 2, kind: input, shape index: {}]
  %s3 = inlined_call_operand.vmem [shape: f32[256,264], index: 3, kind: input, shape index: {}]
  %s4 = inlined_call_operand.vmem [shape: f32[1,264], index: 4, kind: input, shape index: {}]
  %s5 = inlined_call_operand.vmem [shape: f32[8,256], index: 5, kind: input, shape index: {}]
  %s6 = inlined_call_operand.vmem [shape: f32[256,32], index: 6, kind: input, shape index: {}]
  %s7 = inlined_call_operand.hbm [shape: f32[2,32], index: 7, kind: output, shape index: {}]
  %s8 = sld [smem:[#allocation0]]
  $region38: #{tpu_custom_call.1} parent=0
    _
  %s10 = ssub.s32 1, %s8
  %s11 = scalar_select 0, %s10, %s8
  $region1: #{tpu_custom_call.1} parent=0
    #allocation2 [shape = 'u8[1024]{0}', space=vmem, size = 0x400, scoped, tag = 'output window, operand 0, single buffered']
    #allocation3 [shape = 's32[1]{0}', space=sflag, size = 0x4, scoped, tag = 'scoped memory for tpu_custom_call.1']
    %12 = vsyncpa [#allocation3], 0
    // Predicated region
    $region2: #{tpu_custom_call.1} parent=1 // pred_check
      _
    $region3: #{tpu_custom_call.1} parent=1 // pred_check_branch
      %14 = sbr.rel (0) target = $region5
    $region4: #{tpu_custom_call.1} parent=1 // pred_region
      _
    $region5: #{tpu_custom_call.1} parent=1 // pred_fallthru
      _
    // Predicated region
    $region6: #{tpu_custom_call.1} parent=1 // pred_check
      _
    $region7: #{tpu_custom_call.1} parent=1 // pred_check_branch
      %16 = sbr.rel (0) target = $region9
    $region8: #{tpu_custom_call.1} parent=1 // pred_region
      _
    $region9: #{tpu_custom_call.1} parent=1 // pred_fallthru
      _
    // Predicated region
    $region10: #{tpu_custom_call.1} parent=1 // pred_check
      _
    $region11: #{tpu_custom_call.1} parent=1 // pred_check_branch
      %18 = sbr.rel (0) target = $region13
    $region12: #{tpu_custom_call.1} parent=1 // pred_region
      _
    $region13: #{tpu_custom_call.1} parent=1 // pred_fallthru
      _
    // Predicated region
    $region14: #{tpu_custom_call.1} parent=1 // pred_check
      _
    $region15: #{tpu_custom_call.1} parent=1 // pred_check_branch
      %20 = sbr.rel (0) target = $region17
    $region16: #{tpu_custom_call.1} parent=1 // pred_region
      _
    $region17: #{tpu_custom_call.1} parent=1 // pred_fallthru
      _
    // Predicated region
    $region18: #{tpu_custom_call.1} parent=1 // pred_check
      _
    $region19: #{tpu_custom_call.1} parent=1 // pred_check_branch
      %22 = sbr.rel (0) target = $region21
    $region20: #{tpu_custom_call.1} parent=1 // pred_region
      _
    $region21: #{tpu_custom_call.1} parent=1 // pred_fallthru
      _
    // Predicated region
    $region22: #{tpu_custom_call.1} parent=1 // pred_check
      _
    $region23: #{tpu_custom_call.1} parent=1 // pred_check_branch
      %24 = sbr.rel (0) target = $region25
    $region24: #{tpu_custom_call.1} parent=1 // pred_region
      _
    $region25: #{tpu_custom_call.1} parent=1 // pred_fallthru
      _
    // Predicated region
    $region26: #{tpu_custom_call.1} parent=1 // pred_check
      _
    $region27: #{tpu_custom_call.1} parent=1 // pred_check_branch
      %26 = sbr.rel (0) target = $region29
    $region28: #{tpu_custom_call.1} parent=1 // pred_region
      _
    $region29: #{tpu_custom_call.1} parent=1 // pred_fallthru
      _
    %v27 = vld [vmem:[%s0] sm:$0x3]
    %v28 = vld [vmem:[%s1] sm:$0xff]
    %v29 = vld [vmem:[%s1 + $0x8] sm:$0xff]
    %v30 = vld [vmem:[%s1 + $0x10] sm:$0xff]
    %v31 = vld [vmem:[%s1 + $0x18] sm:$0xff]
    %v32 = vld [vmem:[%s1 + $0x20] sm:$0xff]
    %v33 = vld [vmem:[%s1 + $0x28] sm:$0xff]
    %v34 = vld [vmem:[%s1 + $0x30] sm:$0xff]
    %v35 = vld [vmem:[%s1 + $0x38] sm:$0xff]
    %v36 = vld [vmem:[%s1 + $0x40] sm:$0xff]
    %v37 = vld [vmem:[%s1 + $0x48] sm:$0xff]
    %v38 = vld [vmem:[%s1 + $0x50] sm:$0xff]
    %v39 = vld [vmem:[%s1 + $0x58] sm:$0xff]
    %v40 = vld [vmem:[%s1 + $0x60] sm:$0xff]
    %v41 = vld [vmem:[%s1 + $0x68] sm:$0xff]
    %v42 = vld [vmem:[%s1 + $0x70] sm:$0xff]
    %v43 = vld [vmem:[%s1 + $0x78] sm:$0xff]
    %v44 = vld [vmem:[%s1 + $0x80] sm:$0xff]
    %v45 = vld [vmem:[%s1 + $0x88] sm:$0xff]
    %v46 = vld [vmem:[%s1 + $0x90] sm:$0xff]
    %v47 = vld [vmem:[%s1 + $0x98] sm:$0xff]
    %v48 = vld [vmem:[%s1 + $0xa0] sm:$0xff]
    %v49 = vld [vmem:[%s1 + $0xa8] sm:$0xff]
    %v50 = vld [vmem:[%s1 + $0xb0] sm:$0xff]
    %v51 = vld [vmem:[%s1 + $0xb8] sm:$0xff]
    %v52 = vld [vmem:[%s1 + $0xc0] sm:$0xff]
    %v53 = vld [vmem:[%s1 + $0xc8] sm:$0xff]
    %v54 = vld [vmem:[%s1 + $0xd0] sm:$0xff]
    %v55 = vld [vmem:[%s1 + $0xd8] sm:$0xff]
    %v56 = vld [vmem:[%s1 + $0xe0] sm:$0xff]
    %v57 = vld [vmem:[%s1 + $0xe8] sm:$0xff]
    %v58 = vld [vmem:[%s1 + $0xf0] sm:$0xff]
    %v59 = vld [vmem:[%s1 + $0xf8] sm:$0xff]
    %v60 = vld [vmem:[%s2] sm:$0x3]
    %v62 = vperm.slane %v60, 0
    %v63 = vperm.slane %v60, 1
    %66 = vmatpush.msra.mxu0 %v58
    %67 = vmatpush.msra.mxu0 %v56
    %68 = vmatpush.msra.mxu0 %v54
    %69 = vmatpush.msra.mxu0 %v52
    %70 = vmatpush.msra.mxu0 %v50
    %71 = vmatpush.msra.mxu0 %v48
    %72 = vmatpush.msra.mxu0 %v46
    %73 = vmatpush.msra.mxu0 %v44
    %74 = vmatpush.msra.mxu0 %v42
    %75 = vmatpush.msra.mxu0 %v40
    %76 = vmatpush.msra.mxu0 %v38
    %77 = vmatpush.msra.mxu0 %v36
    %78 = vmatpush.msra.mxu0 %v34
    %79 = vmatpush.msra.mxu0 %v32
    %80 = vmatpush.msra.mxu0 %v30
    %81 = vmatpush.msra.mxu0 %v28
    %82 = vmatmul.f32.gmra.mxu0 %v27
    %v83 = vpop.f32.mrf.mxu0
    %v84 = vadd.f32 %v62, %v83
    %85 = vdwg.mxu0
    %86 = vmatpush.msra.mxu0 %v59
    %87 = vmatpush.msra.mxu0 %v57
    %88 = vmatpush.msra.mxu0 %v55
    %89 = vmatpush.msra.mxu0 %v53
    %90 = vmatpush.msra.mxu0 %v51
    %91 = vmatpush.msra.mxu0 %v49
    %92 = vmatpush.msra.mxu0 %v47
    %93 = vmatpush.msra.mxu0 %v45
    %94 = vmatpush.msra.mxu0 %v43
    %95 = vmatpush.msra.mxu0 %v41
    %96 = vmatpush.msra.mxu0 %v39
    %97 = vmatpush.msra.mxu0 %v37
    %98 = vmatpush.msra.mxu0 %v35
    %99 = vmatpush.msra.mxu0 %v33
    %100 = vmatpush.msra.mxu0 %v31
    %101 = vmatpush.msra.mxu0 %v29
    %102 = vmatmul.f32.gmra.mxu0 %v27
    %v103 = vpop.f32.mrf.mxu0
    %v104 = vadd.f32 %v63, %v103
    %105 = vdwg.mxu0
    %v106 = vmax.f32 %v84, 0.0
    %v107 = vmax.f32 %v104, 0.0
    %v108 = vld [vmem:[%s3] sm:$0xff]
    %v109 = vld [vmem:[%s3 + $0x8] sm:$0xff]
    %v110 = vld [vmem:[%s3 + $0x10] sm:$0xff]
    %v111 = vld [vmem:[%s3 + $0x18] sm:$0xff]
    %v112 = vld [vmem:[%s3 + $0x20] sm:$0xff]
    %v113 = vld [vmem:[%s3 + $0x28] sm:$0xff]
    %v114 = vld [vmem:[%s3 + $0x30] sm:$0xff]
    %v115 = vld [vmem:[%s3 + $0x38] sm:$0xff]
    %v116 = vld [vmem:[%s3 + $0x40] sm:$0xff]
    %v117 = vld [vmem:[%s3 + $0x48] sm:$0xff]
    %v118 = vld [vmem:[%s3 + $0x50] sm:$0xff]
    %v119 = vld [vmem:[%s3 + $0x58] sm:$0xff]
    %v120 = vld [vmem:[%s3 + $0x60] sm:$0xff]
    %v121 = vld [vmem:[%s3 + $0x68] sm:$0xff]
    %v122 = vld [vmem:[%s3 + $0x70] sm:$0xff]
    %v123 = vld [vmem:[%s3 + $0x78] sm:$0xff]
    %v124 = vld [vmem:[%s3 + $0x80] sm:$0xff]
    %v125 = vld [vmem:[%s3 + $0x88] sm:$0xff]
    %v126 = vld [vmem:[%s3 + $0x90] sm:$0xff]
    %v127 = vld [vmem:[%s3 + $0x98] sm:$0xff]
    %v128 = vld [vmem:[%s3 + $0xa0] sm:$0xff]
    %v129 = vld [vmem:[%s3 + $0xa8] sm:$0xff]
    %v130 = vld [vmem:[%s3 + $0xb0] sm:$0xff]
    %v131 = vld [vmem:[%s3 + $0xb8] sm:$0xff]
    %v132 = vld [vmem:[%s3 + $0xc0] sm:$0xff]
    %v133 = vld [vmem:[%s3 + $0xc8] sm:$0xff]
    %v134 = vld [vmem:[%s3 + $0xd0] sm:$0xff]
    %v135 = vld [vmem:[%s3 + $0xd8] sm:$0xff]
    %v136 = vld [vmem:[%s3 + $0xe0] sm:$0xff]
    %v137 = vld [vmem:[%s3 + $0xe8] sm:$0xff]
    %v138 = vld [vmem:[%s3 + $0xf0] sm:$0xff]
    %v139 = vld [vmem:[%s3 + $0xf8] sm:$0xff]
    %v140 = vld [vmem:[%s3 + $0x100] sm:$0xff]
    %v141 = vld [vmem:[%s3 + $0x108] sm:$0xff]
    %v142 = vld [vmem:[%s3 + $0x110] sm:$0xff]
    %v143 = vld [vmem:[%s3 + $0x118] sm:$0xff]
    %v144 = vld [vmem:[%s3 + $0x120] sm:$0xff]
    %v145 = vld [vmem:[%s3 + $0x128] sm:$0xff]
    %v146 = vld [vmem:[%s3 + $0x130] sm:$0xff]
    %v147 = vld [vmem:[%s3 + $0x138] sm:$0xff]
    %v148 = vld [vmem:[%s3 + $0x140] sm:$0xff]
    %v149 = vld [vmem:[%s3 + $0x148] sm:$0xff]
    %v150 = vld [vmem:[%s3 + $0x150] sm:$0xff]
    %v151 = vld [vmem:[%s3 + $0x158] sm:$0xff]
    %v152 = vld [vmem:[%s3 + $0x160] sm:$0xff]
    %v153 = vld [vmem:[%s3 + $0x168] sm:$0xff]
    %v154 = vld [vmem:[%s3 + $0x170] sm:$0xff]
    %v155 = vld [vmem:[%s3 + $0x178] sm:$0xff]
    %v156 = vld [vmem:[%s3 + $0x180] sm:$0xff]
    %v157 = vld [vmem:[%s3 + $0x188] sm:$0xff]
    %v158 = vld [vmem:[%s3 + $0x190] sm:$0xff]
    %v159 = vld [vmem:[%s3 + $0x198] sm:$0xff]
    %v160 = vld [vmem:[%s3 + $0x1a0] sm:$0xff]
    %v161 = vld [vmem:[%s3 + $0x1a8] sm:$0xff]
    %v162 = vld [vmem:[%s3 + $0x1b0] sm:$0xff]
    %v163 = vld [vmem:[%s3 + $0x1b8] sm:$0xff]
    %v164 = vld [vmem:[%s3 + $0x1c0] sm:$0xff]
    %v165 = vld [vmem:[%s3 + $0x1c8] sm:$0xff]
    %v166 = vld [vmem:[%s3 + $0x1d0] sm:$0xff]
    %v167 = vld [vmem:[%s3 + $0x1d8] sm:$0xff]
    %v168 = vld [vmem:[%s3 + $0x1e0] sm:$0xff]
    %v169 = vld [vmem:[%s3 + $0x1e8] sm:$0xff]
    %v170 = vld [vmem:[%s3 + $0x1f0] sm:$0xff]
    %v171 = vld [vmem:[%s3 + $0x1f8] sm:$0xff]
    %v172 = vld [vmem:[%s3 + $0x200] sm:$0xff]
    %v173 = vld [vmem:[%s3 + $0x208] sm:$0xff]
    %v174 = vld [vmem:[%s3 + $0x210] sm:$0xff]
    %v175 = vld [vmem:[%s3 + $0x218] sm:$0xff]
    %v176 = vld [vmem:[%s3 + $0x220] sm:$0xff]
    %v177 = vld [vmem:[%s3 + $0x228] sm:$0xff]
    %v178 = vld [vmem:[%s3 + $0x230] sm:$0xff]
    %v179 = vld [vmem:[%s3 + $0x238] sm:$0xff]
    %v180 = vld [vmem:[%s3 + $0x240] sm:$0xff]
    %v181 = vld [vmem:[%s3 + $0x248] sm:$0xff]
    %v182 = vld [vmem:[%s3 + $0x250] sm:$0xff]
    %v183 = vld [vmem:[%s3 + $0x258] sm:$0xff]
    %v184 = vld [vmem:[%s3 + $0x260] sm:$0xff]
    %v185 = vld [vmem:[%s3 + $0x268] sm:$0xff]
    %v186 = vld [vmem:[%s3 + $0x270] sm:$0xff]
    %v187 = vld [vmem:[%s3 + $0x278] sm:$0xff]
    %v188 = vld [vmem:[%s3 + $0x280] sm:$0xff]
    %v189 = vld [vmem:[%s3 + $0x288] sm:$0xff]
    %v190 = vld [vmem:[%s3 + $0x290] sm:$0xff]
    %v191 = vld [vmem:[%s3 + $0x298] sm:$0xff]
    %v192 = vld [vmem:[%s3 + $0x2a0] sm:$0xff]
    %v193 = vld [vmem:[%s3 + $0x2a8] sm:$0xff]
    %v194 = vld [vmem:[%s3 + $0x2b0] sm:$0xff]
    %v195 = vld [vmem:[%s3 + $0x2b8] sm:$0xff]
    %v196 = vld [vmem:[%s3 + $0x2c0] sm:$0xff]
    %v197 = vld [vmem:[%s3 + $0x2c8] sm:$0xff]
    %v198 = vld [vmem:[%s3 + $0x2d0] sm:$0xff]
    %v199 = vld [vmem:[%s3 + $0x2d8] sm:$0xff]
    %v200 = vld [vmem:[%s3 + $0x2e0] sm:$0xff]
    %v201 = vld [vmem:[%s3 + $0x2e8] sm:$0xff]
    %v202 = vld [vmem:[%s3 + $0x2f0] sm:$0xff]
    %v203 = vld [vmem:[%s3 + $0x2f8] sm:$0xff]
    %v204 = vld [vmem:[%s4] sm:$0x7]
    %v206 = vperm.slane %v204, 0
    %v207 = vperm.slane %v204, 1
    %v208 = vperm.slane %v204, 2
    %212 = vmatpush.msra.mxu0 %v153
    %213 = vmatpush.msra.mxu0 %v150
    %214 = vmatpush.msra.mxu0 %v147
    %215 = vmatpush.msra.mxu0 %v144
    %216 = vmatpush.msra.mxu0 %v141
    %217 = vmatpush.msra.mxu0 %v138
    %218 = vmatpush.msra.mxu0 %v135
    %219 = vmatpush.msra.mxu0 %v132
    %220 = vmatpush.msra.mxu0 %v129
    %221 = vmatpush.msra.mxu0 %v126
    %222 = vmatpush.msra.mxu0 %v123
    %223 = vmatpush.msra.mxu0 %v120
    %224 = vmatpush.msra.mxu0 %v117
    %225 = vmatpush.msra.mxu0 %v114
    %226 = vmatpush.msra.mxu0 %v111
    %227 = vmatpush.msra.mxu0 %v108
    %228 = vmatmul.f32.gmra.mxu0 %v106
    %v229 = vpop.f32.mrf.mxu0
    %v230 = vadd.f32 %v206, %v229
    %231 = vdwg.mxu0
    %232 = vmatpush.msra.mxu0 %v201
    %233 = vmatpush.msra.mxu0 %v198
    %234 = vmatpush.msra.mxu0 %v195
    %235 = vmatpush.msra.mxu0 %v192
    %236 = vmatpush.msra.mxu0 %v189
    %237 = vmatpush.msra.mxu0 %v186
    %238 = vmatpush.msra.mxu0 %v183
    %239 = vmatpush.msra.mxu0 %v180
    %240 = vmatpush.msra.mxu0 %v177
    %241 = vmatpush.msra.mxu0 %v174
    %242 = vmatpush.msra.mxu0 %v171
    %243 = vmatpush.msra.mxu0 %v168
    %244 = vmatpush.msra.mxu0 %v165
    %245 = vmatpush.msra.mxu0 %v162
    %246 = vmatpush.msra.mxu0 %v159
    %247 = vmatpush.msra.mxu0 %v156
    %248 = vmatmul.f32.gmra.mxu0 %v107
    %v249 = vpop.f32.mrf.mxu0
    %v250 = vadd.f32 %v230, %v249
    %251 = vdwg.mxu0
    %252 = vmatpush.msra.mxu0 %v154
    %253 = vmatpush.msra.mxu0 %v151
    %254 = vmatpush.msra.mxu0 %v148
    %255 = vmatpush.msra.mxu0 %v145
    %256 = vmatpush.msra.mxu0 %v142
    %257 = vmatpush.msra.mxu0 %v139
    %258 = vmatpush.msra.mxu0 %v136
    %259 = vmatpush.msra.mxu0 %v133
    %260 = vmatpush.msra.mxu0 %v130
    %261 = vmatpush.msra.mxu0 %v127
    %262 = vmatpush.msra.mxu0 %v124
    %263 = vmatpush.msra.mxu0 %v121
    %264 = vmatpush.msra.mxu0 %v118
    %265 = vmatpush.msra.mxu0 %v115
    %266 = vmatpush.msra.mxu0 %v112
    %267 = vmatpush.msra.mxu0 %v109
    %268 = vmatmul.f32.gmra.mxu0 %v106
    %v269 = vpop.f32.mrf.mxu0
    %v270 = vadd.f32 %v207, %v269
    %271 = vdwg.mxu0
    %272 = vmatpush.msra.mxu0 %v202
    %273 = vmatpush.msra.mxu0 %v199
    %274 = vmatpush.msra.mxu0 %v196
    %275 = vmatpush.msra.mxu0 %v193
    %276 = vmatpush.msra.mxu0 %v190
    %277 = vmatpush.msra.mxu0 %v187
    %278 = vmatpush.msra.mxu0 %v184
    %279 = vmatpush.msra.mxu0 %v181
    %280 = vmatpush.msra.mxu0 %v178
    %281 = vmatpush.msra.mxu0 %v175
    %282 = vmatpush.msra.mxu0 %v172
    %283 = vmatpush.msra.mxu0 %v169
    %284 = vmatpush.msra.mxu0 %v166
    %285 = vmatpush.msra.mxu0 %v163
    %286 = vmatpush.msra.mxu0 %v160
    %287 = vmatpush.msra.mxu0 %v157
    %288 = vmatmul.f32.gmra.mxu0 %v107
    %v289 = vpop.f32.mrf.mxu0
    %v290 = vadd.f32 %v270, %v289
    %291 = vdwg.mxu0
    %292 = vmatpush.msra.mxu0 %v155
    %293 = vmatpush.msra.mxu0 %v152
    %294 = vmatpush.msra.mxu0 %v149
    %295 = vmatpush.msra.mxu0 %v146
    %296 = vmatpush.msra.mxu0 %v143
    %297 = vmatpush.msra.mxu0 %v140
    %298 = vmatpush.msra.mxu0 %v137
    %299 = vmatpush.msra.mxu0 %v134
    %300 = vmatpush.msra.mxu0 %v131
    %301 = vmatpush.msra.mxu0 %v128
    %302 = vmatpush.msra.mxu0 %v125
    %303 = vmatpush.msra.mxu0 %v122
    %304 = vmatpush.msra.mxu0 %v119
    %305 = vmatpush.msra.mxu0 %v116
    %306 = vmatpush.msra.mxu0 %v113
    %307 = vmatpush.msra.mxu0 %v110
    %308 = vmatmul.f32.gmra.mxu0 %v106
    %v309 = vpop.f32.mrf.mxu0
    %v310 = vadd.f32 %v208, %v309
    %311 = vdwg.mxu0
    %312 = vmatpush.msra.mxu0 %v203
    %313 = vmatpush.msra.mxu0 %v200
    %314 = vmatpush.msra.mxu0 %v197
    %315 = vmatpush.msra.mxu0 %v194
    %316 = vmatpush.msra.mxu0 %v191
    %317 = vmatpush.msra.mxu0 %v188
    %318 = vmatpush.msra.mxu0 %v185
    %319 = vmatpush.msra.mxu0 %v182
    %320 = vmatpush.msra.mxu0 %v179
    %321 = vmatpush.msra.mxu0 %v176
    %322 = vmatpush.msra.mxu0 %v173
    %323 = vmatpush.msra.mxu0 %v170
    %324 = vmatpush.msra.mxu0 %v167
    %325 = vmatpush.msra.mxu0 %v164
    %326 = vmatpush.msra.mxu0 %v161
    %327 = vmatpush.msra.mxu0 %v158
    %328 = vmatmul.f32.gmra.mxu0 %v107
    %v329 = vpop.f32.mrf.mxu0
    %v330 = vadd.f32 %v310, %v329
    %331 = vdwg.mxu0
    %vm332 = vcmask 58368
    %v333 = vsel %vm332, %v330, -inf
    %334 = vmax.xlane.f32.xlu0 %v333
    %v335 = vpop.xlane.xlu0 %334
    %v336 = vsub.f32 %v330, %v335
    %v337 = vmul.f32 %v336, 1.442695
    %v338 = vpow.pop %v337
    %v339 = vsel %vm332, %v338, 0.0
    %340 = vadd.xlane.f32.xlu0 %v339
    %v341 = vpop.xlane.xlu0 %340
    %v342 = vrcp.pop %v341
    %v343 = vmul.f32 %v341, %v342
    %v344 = vsub.f32 1.0, %v343
    %v345 = vmul.f32 %v342, %v344
    %v346 = vadd.f32 %v342, %v345
    %vm347 = vweird.f32 %v341
    %vm348 = vweird.f32 %v342
    %vm349 = vmor %vm347, %vm348
    %v350 = vsel %vm349, %v342, %v346
    %v351 = vand.u32 2147483647, %v341
    %vm352 = vcmp.eq.f32.partialorder %v351, 8.507059e+37
    %v353 = vand.u32 %v341, 2147483648
    %v354 = vor.u32 1.1754944e-38, %v353
    %v355 = vsel %vm352, %v354, %v350
    %v356 = vmul.f32 %v338, %v355
    %v357 = vld [vmem:[%s5] sm:$0xff]
    %v358 = vld [vmem:[%s5 + $0x8] sm:$0xff]
    %vm359 = vcmask 64512
    %v361 = vsel %vm359, %v356, 0
    %363 = vmatpush.msra.mxu0 0.0
    %364 = vmatpush.msra.mxu0 0.0
    %365 = vmatpush.msra.mxu0 0.0
    %366 = vmatpush.msra.mxu0 0.0
    %367 = vmatpush.msra.mxu0 0.0
    %368 = vmatpush.msra.mxu0 0.0
    %369 = vmatpush.msra.mxu0 0.0
    %370 = vmatpush.msra.mxu0 0.0
    %371 = vmatpush.msra.mxu0 0.0
    %372 = vmatpush.msra.mxu0 0.0
    %373 = vmatpush.msra.mxu0 0.0
    %374 = vmatpush.msra.mxu0 0.0
    %375 = vmatpush.msra.mxu0 0.0
    %376 = vmatpush.msra.mxu0 0.0
    %377 = vmatpush.msra.mxu0 0.0
    %378 = vmatpush.msra.mxu0 %v357
    %379 = vmatmul.f32.gmra.mxu0 %v361
    %v380 = vpop.f32.mrf.mxu0
    %v381 = vadd.f32 0.0, %v380
    %382 = vdwg.mxu0
    %383 = vmatpush.msra.mxu0 0.0
    %384 = vmatpush.msra.mxu0 0.0
    %385 = vmatpush.msra.mxu0 0.0
    %386 = vmatpush.msra.mxu0 0.0
    %387 = vmatpush.msra.mxu0 0.0
    %388 = vmatpush.msra.mxu0 0.0
    %389 = vmatpush.msra.mxu0 0.0
    %390 = vmatpush.msra.mxu0 0.0
    %391 = vmatpush.msra.mxu0 0.0
    %392 = vmatpush.msra.mxu0 0.0
    %393 = vmatpush.msra.mxu0 0.0
    %394 = vmatpush.msra.mxu0 0.0
    %395 = vmatpush.msra.mxu0 0.0
    %396 = vmatpush.msra.mxu0 0.0
    %397 = vmatpush.msra.mxu0 0.0
    %398 = vmatpush.msra.mxu0 %v358
    %399 = vmatmul.f32.gmra.mxu0 %v361
    %v400 = vpop.f32.mrf.mxu0
    %v401 = vadd.f32 0.0, %v400
    %402 = vdwg.mxu0
    %v403 = vmul.f32 %v250, %v381
    %v404 = vmul.f32 %v290, %v401
    %v405 = vld [vmem:[%s6] sm:$0xff]
    %v406 = vld [vmem:[%s6 + $0x8] sm:$0xff]
    %v407 = vld [vmem:[%s6 + $0x10] sm:$0xff]
    %v408 = vld [vmem:[%s6 + $0x18] sm:$0xff]
    %v409 = vld [vmem:[%s6 + $0x20] sm:$0xff]
    %v410 = vld [vmem:[%s6 + $0x28] sm:$0xff]
    %v411 = vld [vmem:[%s6 + $0x30] sm:$0xff]
    %v412 = vld [vmem:[%s6 + $0x38] sm:$0xff]
    %v413 = vld [vmem:[%s6 + $0x40] sm:$0xff]
    %v414 = vld [vmem:[%s6 + $0x48] sm:$0xff]
    %v415 = vld [vmem:[%s6 + $0x50] sm:$0xff]
    %v416 = vld [vmem:[%s6 + $0x58] sm:$0xff]
    %v417 = vld [vmem:[%s6 + $0x60] sm:$0xff]
    %v418 = vld [vmem:[%s6 + $0x68] sm:$0xff]
    %v419 = vld [vmem:[%s6 + $0x70] sm:$0xff]
    %v420 = vld [vmem:[%s6 + $0x78] sm:$0xff]
    %v421 = vld [vmem:[%s6 + $0x80] sm:$0xff]
    %v422 = vld [vmem:[%s6 + $0x88] sm:$0xff]
    %v423 = vld [vmem:[%s6 + $0x90] sm:$0xff]
    %v424 = vld [vmem:[%s6 + $0x98] sm:$0xff]
    %v425 = vld [vmem:[%s6 + $0xa0] sm:$0xff]
    %v426 = vld [vmem:[%s6 + $0xa8] sm:$0xff]
    %v427 = vld [vmem:[%s6 + $0xb0] sm:$0xff]
    %v428 = vld [vmem:[%s6 + $0xb8] sm:$0xff]
    %v429 = vld [vmem:[%s6 + $0xc0] sm:$0xff]
    %v430 = vld [vmem:[%s6 + $0xc8] sm:$0xff]
    %v431 = vld [vmem:[%s6 + $0xd0] sm:$0xff]
    %v432 = vld [vmem:[%s6 + $0xd8] sm:$0xff]
    %v433 = vld [vmem:[%s6 + $0xe0] sm:$0xff]
    %v434 = vld [vmem:[%s6 + $0xe8] sm:$0xff]
    %v435 = vld [vmem:[%s6 + $0xf0] sm:$0xff]
    %v436 = vld [vmem:[%s6 + $0xf8] sm:$0xff]
    %437 = vmatpush.msra.mxu0 %v420
    %438 = vmatpush.msra.mxu0 %v419
    %439 = vmatpush.msra.mxu0 %v418
    %440 = vmatpush.msra.mxu0 %v417
    %441 = vmatpush.msra.mxu0 %v416
    %442 = vmatpush.msra.mxu0 %v415
    %443 = vmatpush.msra.mxu0 %v414
    %444 = vmatpush.msra.mxu0 %v413
    %445 = vmatpush.msra.mxu0 %v412
    %446 = vmatpush.msra.mxu0 %v411
    %447 = vmatpush.msra.mxu0 %v410
    %448 = vmatpush.msra.mxu0 %v409
    %449 = vmatpush.msra.mxu0 %v408
    %450 = vmatpush.msra.mxu0 %v407
    %451 = vmatpush.msra.mxu0 %v406
    %452 = vmatpush.msra.mxu0 %v405
    %453 = vmatmul.f32.gmra.mxu0 %v403
    %v454 = vpop.f32.mrf.mxu0
    %v455 = vadd.f32 0.0, %v454
    %456 = vdwg.mxu0
    %457 = vmatpush.msra.mxu0 %v436
    %458 = vmatpush.msra.mxu0 %v435
    %459 = vmatpush.msra.mxu0 %v434
    %460 = vmatpush.msra.mxu0 %v433
    %461 = vmatpush.msra.mxu0 %v432
    %462 = vmatpush.msra.mxu0 %v431
    %463 = vmatpush.msra.mxu0 %v430
    %464 = vmatpush.msra.mxu0 %v429
    %465 = vmatpush.msra.mxu0 %v428
    %466 = vmatpush.msra.mxu0 %v427
    %467 = vmatpush.msra.mxu0 %v426
    %468 = vmatpush.msra.mxu0 %v425
    %469 = vmatpush.msra.mxu0 %v424
    %470 = vmatpush.msra.mxu0 %v423
    %471 = vmatpush.msra.mxu0 %v422
    %472 = vmatpush.msra.mxu0 %v421
    %473 = vmatmul.f32.gmra.mxu0 %v404
    %v474 = vpop.f32.mrf.mxu0
    %v475 = vadd.f32 %v455, %v474
    %476 = vdwg.mxu0
    %vm477 = vcmask 254976
    %478 = vst.msk [vmem:[#allocation2] sm:$0x3] %vm477, %v475
    // Predicated region
    $region30: #{tpu_custom_call.1} parent=1 // pred_check
      _
    $region31: #{tpu_custom_call.1} parent=1 // pred_check_branch
      %480 = sbr.rel (0) target = $region33
    $region32: #{tpu_custom_call.1} parent=1 // pred_region
      %482 = vsyncadd [#allocation3], 0
      %s484 = sshll.u32 [#allocation2], 4
      %s485 = int_to_ptr.vmem [resolvable:$true] %s484
      %s486 = sshll.u32 %s7, 4
      %s487 = int_to_ptr.hbm [resolvable:$true] %s486
      %489 = dma.vmem_to_hbm [thread:$0]  %s485, 32, %s487, [#allocation3]
    $region33: #{tpu_custom_call.1} parent=1 // pred_fallthru
      _
    // Predicated region
    $region34: #{tpu_custom_call.1} parent=1 // pred_check
      _
    $region35: #{tpu_custom_call.1} parent=1 // pred_check_branch
      %491 = sbr.rel (0) target = $region37
    $region36: #{tpu_custom_call.1} parent=1 // pred_region
      %493 = dma.done [#allocation3], 32
    $region37: #{tpu_custom_call.1} parent=1 // pred_fallthru
      _
    %494 = vsyncpa [#allocation3], 1

</llo_original>
